<compile_context>
chip_gen: v7x
topology: tpu7x:2x2x1
jax: 0.10.0
libtpu: 0.0.40
codegen_flags: <defaults>
</compile_context>

<pallas_src>
import jax
import jax.numpy as jnp
from jax import lax
from jax.experimental import pallas as pl
from jax.experimental.pallas import tpu as pltpu


def _pos_channel_emb_kernel(slab_ref, out_ref):
    """Replicate the unique slab across the batch rows of this block.

    slab_ref : (8, L)  VMEM  8 identical sublane-rows of the combined slab
    out_ref  : (bb, L) VMEM  lane/sublane-dense output block (bb batch rows)
    """
    bb, _ = out_ref.shape
    slab8 = slab_ref[...]                           # 8 dense sublane-rows
    n8, rem = bb // 8, bb % 8

    if n8 > 0:
        if n8 <= 8:                                 # short: static unroll
            for i in range(n8):
                out_ref[pl.ds(i * 8, 8), :] = slab8
        else:
            def body(i, carry):
                out_ref[pl.ds(pl.multiple_of(i * 8, 8), 8), :] = slab8
                return carry
            lax.fori_loop(0, n8, body, 0, unroll=8)

    if rem:                                         # at most one masked store
        out_ref[pl.ds(n8 * 8, rem), :] = slab8[:rem, :]


def _choose_block_rows(batch_size, row_bytes):
    """Pick the per-step batch-chunk size (dense rows, ~4 MiB blocks)."""
    TARGET_BLOCK_BYTES = 4 << 20   # 4 MiB x 2 buffers = 8 MiB < 16 MiB (v5e scoped default)
    MIN_SPLIT_BYTES = 1 << 20      # only split for megacore if each core gets >= 1 MiB
    total = batch_size * row_bytes

    if total <= TARGET_BLOCK_BYTES:
        if batch_size > 8 and total >= 2 * MIN_SPLIT_BYTES:
            half = -(-batch_size // 2)
            bb = ((half + 7) // 8) * 8             # keep blocks 8-row aligned
            if bb >= batch_size:
                bb = batch_size
        else:
            bb = batch_size                        # whole output in one step
    else:
        bb = max(8, (TARGET_BLOCK_BYTES // row_bytes) // 8 * 8)
        bb = min(bb, batch_size)
        steps = -(-batch_size // bb)
        if steps > 1 and steps % 2:                # keep both v7x cores balanced
            steps += 1
            bb = ((-(-batch_size // steps) + 7) // 8) * 8
            bb = min(max(bb, 8), batch_size)
    return bb


def positional_channel_embedding(pos_emb, channel_emb, batch_size):
    """Pallas equivalent of PositionalChannelEmbedding.forward(batch_size).

    pos_emb     : (seg_num_y, d_half) float32
    channel_emb : (enc_in,    d_half) float32
    returns     : (batch_size * enc_in * seg_num_y, 1, d_model) float32
    """
    seg_num_y, d_half = pos_emb.shape
    enc_in, d_half2 = channel_emb.shape
    assert d_half == d_half2, "pos_emb / channel_emb d_half mismatch"
    d_model = 2 * d_half
    L = enc_in * seg_num_y * d_model               # dense fast axis per batch row
    dtype = pos_emb.dtype

    # Unique combined slab, built once in plain JAX (only ~L*4 bytes), then
    # stacked to 8 identical sublane-rows so the kernel's replication stores
    # are unmasked full 8-sublane vreg stores.
    pos_b = jnp.broadcast_to(pos_emb[None], (enc_in, seg_num_y, d_half))
    ch_b = jnp.broadcast_to(channel_emb[:, None], (enc_in, seg_num_y, d_half))
    slab = jnp.concatenate([pos_b, ch_b], axis=-1).reshape(1, L)
    slab8 = jnp.broadcast_to(slab, (8, L))

    row_bytes = L * dtype.itemsize
    bb = _choose_block_rows(batch_size, row_bytes)
    grid = (pl.cdiv(batch_size, bb),)

    out = pl.pallas_call(
        _pos_channel_emb_kernel,
        out_shape=jax.ShapeDtypeStruct((batch_size, L), dtype),
        grid_spec=pltpu.PrefetchScalarGridSpec(
            num_scalar_prefetch=0,
            grid=grid,
            in_specs=[
                # tiny constant-index input: DMA'd once for the whole grid
                pl.BlockSpec((8, L), lambda i: (0, 0)),
            ],
            out_specs=pl.BlockSpec((bb, L), lambda i: (i, 0)),
        ),
        compiler_params=pltpu.CompilerParams(
            dimension_semantics=("parallel",)),
    )(slab8)

    # (B, C*S*D) row-major has the same element order as torch's
    # view(-1, 1, d_model).repeat(batch, 1, 1).  The (..., 1, d_model) layout
    # is tile-padded on TPU, so this reshape is a relayout copy outside the
    # kernel; consumers that accept (B, C*S*D) should use `out` directly.
    return out.reshape(batch_size * enc_in * seg_num_y, 1, d_model)


def _reference(pos_emb, channel_emb, batch_size):
    """Pure-JAX reference mirroring the PyTorch forward exactly."""
    seg_num_y, d_half = pos_emb.shape
    enc_in = channel_emb.shape[0]
    d_model = 2 * d_half
    pos_b = jnp.broadcast_to(pos_emb[None], (enc_in, seg_num_y, d_half))
    ch_b = jnp.broadcast_to(channel_emb[:, None], (enc_in, seg_num_y, d_half))
    combined = jnp.concatenate([pos_b, ch_b], axis=-1).reshape(-1, 1, d_model)
    return jnp.tile(combined, (batch_size, 1, 1))


if __name__ == "__main__":
    # Module config consistent with the forward: seg_num_y=8, enc_in=4, d_model=32
    seg_num_y, enc_in, d_model = 8, 4, 32
    d_half = d_model // 2
    batch_size = 2

    key = jax.random.PRNGKey(0)
    k_pos, k_ch = jax.random.split(key)
    pos_emb = jax.random.normal(k_pos, (seg_num_y, d_half), dtype=jnp.float32)
    channel_emb = jax.random.normal(k_ch, (enc_in, d_half), dtype=jnp.float32)

    out = positional_channel_embedding(pos_emb, channel_emb, batch_size)
    out = jax.block_until_ready(out)

    ref = _reference(pos_emb, channel_emb, batch_size)
    assert out.shape == (batch_size * enc_in * seg_num_y, 1, d_model), out.shape
    assert jnp.allclose(out, ref), "mismatch vs reference"

    print("KERNEL_OK")
</pallas_src>

<mosaic_0001>
module attributes {stable_mosaic.version = 11 : i64} {
  func.func @_pos_channel_emb_kernel(%arg0: i32, %arg1: memref<8x1024xf32, #tpu.memory_space<vmem>>, %arg2: memref<2x1024xf32, #tpu.memory_space<vmem>>) attributes {dimension_semantics = [#tpu.dimension_semantics<parallel>], iteration_bounds = array<i64: 1>, scalar_prefetch = 0 : i64, scratch_operands = 0 : i64, tpu.core_type = #tpu.core_type<tc>, window_params = [{pipeline_mode = #tpu.pipeline_mode<synchronous>, transform_indices = @transform_0, window_bounds = array<i64: 8, 1024>}, {transform_indices = @transform_1, window_bounds = array<i64: 2, 1024>}]} {
    %c0 = arith.constant 0 : index
    %c0_0 = arith.constant 0 : index
    %0 = vector.load %arg1[%c0, %c0_0] : memref<8x1024xf32, #tpu.memory_space<vmem>>, vector<8x1024xf32>
    %1 = vector.extract_strided_slice %0 {offsets = [0, 0], sizes = [2, 1024], strides = [1, 1]} : vector<8x1024xf32> to vector<2x1024xf32>
    %c0_1 = arith.constant 0 : index
    %c0_2 = arith.constant 0 : index
    %2 = vector.load %arg2[%c0_1, %c0_2] : memref<2x1024xf32, #tpu.memory_space<vmem>>, vector<2x1024xf32>
    tpu.vector_store %arg2[%c0_1, %c0_2], %1 {strides = array<i32>} : memref<2x1024xf32, #tpu.memory_space<vmem>>, vector<2x1024xf32>,
    return
  }
  func.func @transform_0(%arg0: i32) -> (i32, i32) {
    %c0_i32 = arith.constant 0 : i32
    %c0_i32_0 = arith.constant 0 : i32
    %c0_i32_1 = arith.constant 0 : i32
    return %c0_i32, %c0_i32_0 : i32, i32
  }
  func.func @transform_1(%arg0: i32) -> (i32, i32) {
    %c0_i32 = arith.constant 0 : i32
    %c0_i32_0 = arith.constant 0 : i32
    return %arg0, %c0_i32 : i32, i32
  }
}

</mosaic_0001>

<llo_original>
// kernel: tpu_custom_call.1
$region0: #{tpu_custom_call.1}
  #allocation0 [shape = 'u32[]', space=smem, size = 0x4, offset = 0x4, fixed_abs, tag = 'smem constant byte address 0x4 - core index']
  #allocation1 [shape = 'u32[144,128]{1,0:T(1,128)}', space=vmem, size = 0x12000, scoped, tag = 'internal scratch']
  %s0 = inlined_call_operand.hbm [shape: f32[8,1024], index: 0, kind: input, shape index: {}]
  %s1 = inlined_call_operand.hbm [shape: f32[2,1024], index: 1, kind: output, shape index: {}]
  %s2 = sld [smem:[#allocation0]]
  $region18: #{tpu_custom_call.1} parent=0
    _
  %s4 = ssub.s32 1, %s2
  %s5 = scalar_select 0, %s4, %s2
  $region1: #{tpu_custom_call.1} parent=0
    #allocation2 [shape = 'u8[32768]{0}', space=vmem, size = 0x8000, scoped, tag = 'input window, operand 0, single buffered']
    #allocation3 [shape = 's32[1]{0}', space=sflag, size = 0x4, scoped, tag = 'scoped memory for tpu_custom_call.1']
    #allocation4 [shape = 's32[1]{0}', space=sflag, size = 0x4, scoped, tag = 'scoped memory for tpu_custom_call.1']
    #allocation5 [shape = 'u8[8192]{0}', space=vmem, size = 0x2000, scoped, tag = 'output window, operand 0, single buffered']
    %6 = vsyncpa [#allocation3], 0
    %7 = vsyncpa [#allocation4], 0
    // Predicated region
    $region2: #{tpu_custom_call.1} parent=1 // pred_check
      _
    $region3: #{tpu_custom_call.1} parent=1 // pred_check_branch
      %9 = sbr.rel (0) target = $region5
    $region4: #{tpu_custom_call.1} parent=1 // pred_region
      %s11 = ssub.s32 1024, 1024
      %12 = vsyncadd [#allocation3], %s11
      %s14 = sshll.u32 [#allocation2], 4
      %s15 = int_to_ptr.vmem [resolvable:$true] %s14
      %17 = dma.hbm_to_vmem [thread:$0]  %s0, 1024, %s15, [#allocation3]
    $region5: #{tpu_custom_call.1} parent=1 // pred_fallthru
      _
    // Predicated region
    $region6: #{tpu_custom_call.1} parent=1 // pred_check
      _
    $region7: #{tpu_custom_call.1} parent=1 // pred_check_branch
      %19 = sbr.rel (0) target = $region9
    $region8: #{tpu_custom_call.1} parent=1 // pred_region
      %20 = dma.done [#allocation3], 1024
    $region9: #{tpu_custom_call.1} parent=1 // pred_fallthru
      _
    %v21 = vld [vmem:[#allocation2] sm:$0xff]
    %v22 = vld [vmem:[#allocation2 + $0x8] sm:$0xff]
    %v23 = vld [vmem:[#allocation2 + $0x10] sm:$0xff]
    %v24 = vld [vmem:[#allocation2 + $0x18] sm:$0xff]
    %v25 = vld [vmem:[#allocation2 + $0x20] sm:$0xff]
    %v26 = vld [vmem:[#allocation2 + $0x28] sm:$0xff]
    %v27 = vld [vmem:[#allocation2 + $0x30] sm:$0xff]
    %v28 = vld [vmem:[#allocation2 + $0x38] sm:$0xff]
    %v37 = vcombine.low %v21, %v22
    %v38 = vcombine.low %v23, %v24
    %v40 = vunpack.c.l.s4 1983009808
    %v41 = vunpack.c.0.s8 %v40
    %v42 = vlaneseq
    %v43 = vshrl.u32 %v42, 7
    %v44 = vsub.s32 %v41, %v43
    %v45 = vrot.slane %v37, %v44
    %v47 = vunpack.c.l.s4 1983009808
    %v48 = vunpack.c.0.s8 %v47
    %v49 = vlaneseq
    %v50 = vshrl.u32 %v49, 7
    %v51 = vsub.s32 %v48, %v50
    %v52 = vrot.slane %v38, %v51
    %v53 = vcombine.low %v45, %v52
    %v54 = vcombine.low %v25, %v26
    %v55 = vcombine.low %v27, %v28
    %v57 = vunpack.c.l.s4 1983009808
    %v58 = vunpack.c.0.s8 %v57
    %v59 = vlaneseq
    %v60 = vshrl.u32 %v59, 7
    %v61 = vsub.s32 %v58, %v60
    %v62 = vrot.slane %v54, %v61
    %v64 = vunpack.c.l.s4 1983009808
    %v65 = vunpack.c.0.s8 %v64
    %v66 = vlaneseq
    %v67 = vshrl.u32 %v66, 7
    %v68 = vsub.s32 %v65, %v67
    %v69 = vrot.slane %v55, %v68
    %v70 = vcombine.low %v62, %v69
    %73 = vst [vmem:[#allocation5] sm:$0xff] %v53
    %74 = vst [vmem:[#allocation5 + $0x8] sm:$0xff] %v70
    // Predicated region
    $region10: #{tpu_custom_call.1} parent=1 // pred_check
      _
    $region11: #{tpu_custom_call.1} parent=1 // pred_check_branch
      %76 = sbr.rel (0) target = $region13
    $region12: #{tpu_custom_call.1} parent=1 // pred_region
      %s78 = ssub.s32 256, 256
      %79 = vsyncadd [#allocation4], %s78
      %s81 = sshll.u32 [#allocation5], 4
      %s82 = int_to_ptr.vmem [resolvable:$true] %s81
      %84 = dma.vmem_to_hbm [thread:$0]  %s82, 256, %s1, [#allocation4]
    $region13: #{tpu_custom_call.1} parent=1 // pred_fallthru
      _
    // Predicated region
    $region14: #{tpu_custom_call.1} parent=1 // pred_check
      _
    $region15: #{tpu_custom_call.1} parent=1 // pred_check_branch
      %86 = sbr.rel (0) target = $region17
    $region16: #{tpu_custom_call.1} parent=1 // pred_region
      %87 = dma.done [#allocation4], 256
    $region17: #{tpu_custom_call.1} parent=1 // pred_fallthru
      _
    %88 = vsyncpa [#allocation3], 1
    %89 = vsyncpa [#allocation4], 1

</llo_original>
